<compile_context>
chip_gen: v6e
topology: v6e:2x2x1
jax: 0.10.0
libtpu: 0.0.40
codegen_flags: <defaults>
</compile_context>

<pallas_src>
import functools

import jax
import jax.numpy as jnp
from jax import lax
from jax.experimental import pallas as pl
from jax.experimental.pallas import tpu as pltpu

_LEAKY_SLOPE = 0.01   # nn.LeakyReLU default negative_slope
_BN_EPS = 1e-5        # nn.BatchNorm2d default eps


def _banded_weight(wf, w_in_padded, w_out):
    """Width-banded (block-Toeplitz) weights for the lane-folded conv.

    wf : (K, K, Cin, Cout)  fused KxK conv weights, indexed [kh, kw, ci, co]
    returns (K, w_in_padded*Cin, w_out*Cout) with
        out[kh, w*Cin + ci, j*Cout + co] = wf[kh, w - j, ci, co]  if 0<=w-j<K
                                           else 0
    so that  Y[i, j*Cout+co] = sum_kh  Xp[i+kh, :] @ out[kh]  reproduces the
    stride-1 convolution with the W axis folded onto the lane axis.
    """
    K, _, Cin, Cout = wf.shape
    w_idx = jnp.arange(w_in_padded)[:, None]            # (Wp, 1)
    j_idx = jnp.arange(w_out)[None, :]                  # (1, Wo)
    kw = w_idx - j_idx                                   # (Wp, Wo)
    valid = (kw >= 0) & (kw < K)
    kw_c = jnp.clip(kw, 0, K - 1)
    g = wf[:, kw_c, :, :]                                # (K, Wp, Wo, Cin, Cout)
    g = jnp.where(valid[None, :, :, None, None], g, 0.0)
    g = jnp.transpose(g, (0, 1, 3, 2, 4))                # (K, Wp, Cin, Wo, Cout)
    return g.reshape(K, w_in_padded * Cin, w_out * Cout)


def _pick_batch_block(n, rows_per_image):
    """Fold batch into the matmul M dim, but keep >=2 grid steps when the
    batch allows (megacore / pipelining), and cap M around ~1024 rows."""
    if n <= 1:
        return 1
    best = 1
    for b in range(1, n + 1):
        if n % b == 0 and n // b >= 2 and b * rows_per_image <= 1024:
            best = b
    return best


def _decoder_block_kernel(x_ref, shift_ref, wb1_ref, wb2_ref, o_ref,
                          xp_scr, yp_scr, *, pad, n_taps, cin, cout,
                          H, W, H1, W1, H2, W2, Wp, W1p):
    """Whole DecoderBlock for a block of B images, W folded onto lanes.

    x_ref    : (B, H,  W*Cin)        lane-folded NHWC input
    shift_ref: (1, 1,  W*Cin)        BN additive term (scale folded into wb1)
    wb1_ref  : (K, Wp*Cin,  W1*Cout) banded DSConv#1 weights (bf16)
    wb2_ref  : (K, W1p*Cout, W2*Cout) banded DSConv#2 weights (bf16)
    o_ref    : (B, H2, W2*Cout)      lane-folded output
    xp_scr   : (B, H+2p,  Wp*Cin)    padded conv-1 input scratch  (bf16)
    yp_scr   : (B, H1+2p, W1p*Cout)  padded conv-2 input scratch  (bf16)
    """
    B = x_ref.shape[0]

    # Zero the padded scratches.  Only the border strictly needs it, and only
    # once per core, but the scratches are a few KiB so re-zeroing per step is
    # cheap and stays correct even when the "parallel" batch axis is split
    # across TensorCores (a pl.when(program_id==0) init would miss core 1).
    xp_scr[...] = jnp.zeros(xp_scr.shape, xp_scr.dtype)
    yp_scr[...] = jnp.zeros(yp_scr.shape, yp_scr.dtype)

    # BatchNorm2d (inference affine).  The per-channel scale is folded into
    # wb1 in the wrapper; only the additive part runs here, on the lane-dense
    # folded (H, W*Cin) view, in f32 (v5e has no bf16 VPU datapath).
    xbn = x_ref[...].astype(jnp.float32) + shift_ref[...]

    # Write the BN'd interior into the zero-bordered scratch (bf16 MXU side).
    xp_scr[:, pad:pad + H, pad * cin:(pad + W) * cin] = xbn.astype(jnp.bfloat16)

    # DSConv2d #1 (3x3 Cin->Cin fused with 1x1 Cin->Cout, BN scale folded in):
    # K matmuls, one per kernel row, against banded weights.  No im2col
    # concatenate; the result is already in the lane-dense (W1*Cout) layout.
    acc = jnp.zeros((B * H1, W1 * cout), jnp.float32)
    for kh in range(n_taps):
        xs = xp_scr[:, kh:kh + H1, :].reshape(B * H1, Wp * cin)
        acc = acc + jnp.dot(xs, wb1_ref[kh], preferred_element_type=jnp.float32)
    y = jnp.maximum(acc, _LEAKY_SLOPE * acc)          # LeakyReLU (vmul + vmax)

    # Inter-conv intermediate never leaves VMEM: store into padded scratch #2.
    yp_scr[:, pad:pad + H1, pad * cout:(pad + W1) * cout] = (
        y.reshape(B, H1, W1 * cout).astype(jnp.bfloat16))

    # DSConv2d #2 (3x3 Cout->Cout fused with 1x1 Cout->Cout) + LeakyReLU.
    acc2 = jnp.zeros((B * H2, W2 * cout), jnp.float32)
    for kh in range(n_taps):
        ys = yp_scr[:, kh:kh + H2, :].reshape(B * H2, W1p * cout)
        acc2 = acc2 + jnp.dot(ys, wb2_ref[kh], preferred_element_type=jnp.float32)
    z = jnp.maximum(acc2, _LEAKY_SLOPE * acc2)

    o_ref[...] = z.reshape(B, H2, W2 * cout).astype(o_ref.dtype)


def decoder_block(x_nchw, bn_gamma, bn_beta, bn_mean, bn_var,
                  w1_3x3, w1_1x1, w2_3x3, w2_1x1, *, padding=1, b_block=None):
    """DecoderBlock forward (inference-mode BatchNorm).  NCHW in / NCHW out."""
    N, Cin, H, W = x_nchw.shape
    K = w1_3x3.shape[-1]
    Cout = w1_1x1.shape[0]
    p = padding
    H1 = H + 2 * p - K + 1
    W1 = W + 2 * p - K + 1
    H2 = H1 + 2 * p - K + 1
    W2 = W1 + 2 * p - K + 1
    Hp, Wp = H + 2 * p, W + 2 * p
    H1p, W1p = H1 + 2 * p, W1 + 2 * p

    # BatchNorm2d (eval) folded: the multiplicative part goes into the conv-1
    # weights (exact, commutes with zero padding); the additive part is applied
    # in-kernel BEFORE padding.  Assumes gamma != 0 (standard).
    scale = bn_gamma / jnp.sqrt(bn_var + _BN_EPS)               # (Cin,)
    shift_adj = bn_beta / scale - bn_mean                        # x + shift_adj
    shift_tiled = jnp.tile(shift_adj, W).reshape(1, 1, W * Cin).astype(jnp.float32)

    # Fuse each DSConv2d's 1x1 conv into its 3x3 conv (exact; no nonlinearity
    # in between); fold BN scale into conv-1.
    wf1 = jnp.einsum('mikl,om->klio', w1_3x3, w1_1x1[:, :, 0, 0])
    wf1 = wf1 * scale[None, None, :, None]                       # (K,K,Cin,Cout)
    wf2 = jnp.einsum('mikl,om->klio', w2_3x3, w2_1x1[:, :, 0, 0])  # (K,K,Cout,Cout)

    # Width-banded weights so the whole conv runs in the lane-folded layout.
    wb1 = _banded_weight(wf1, Wp, W1).astype(jnp.bfloat16)      # (K, Wp*Cin,  W1*Cout)
    wb2 = _banded_weight(wf2, W1p, W2).astype(jnp.bfloat16)     # (K, W1p*Cout, W2*Cout)

    # NCHW -> lane-folded (N, H, W*Cin): small channel count folded onto lanes.
    x_folded = jnp.transpose(x_nchw, (0, 2, 3, 1)).reshape(N, H, W * Cin)

    if b_block is None:
        b_block = _pick_batch_block(N, H1)
    assert N % b_block == 0
    n_steps = N // b_block

    kernel = functools.partial(
        _decoder_block_kernel, pad=p, n_taps=K, cin=Cin, cout=Cout,
        H=H, W=W, H1=H1, W1=W1, H2=H2, W2=W2, Wp=Wp, W1p=W1p)

    out_folded = pl.pallas_call(
        kernel,
        out_shape=jax.ShapeDtypeStruct((N, H2, W2 * Cout), x_nchw.dtype),
        grid_spec=pltpu.PrefetchScalarGridSpec(
            num_scalar_prefetch=0,
            grid=(n_steps,),
            in_specs=[
                pl.BlockSpec((b_block, H, W * Cin), lambda n: (n, 0, 0)),
                pl.BlockSpec((1, 1, W * Cin), lambda n: (0, 0, 0)),
                pl.BlockSpec((K, Wp * Cin, W1 * Cout), lambda n: (0, 0, 0)),
                pl.BlockSpec((K, W1p * Cout, W2 * Cout), lambda n: (0, 0, 0)),
            ],
            out_specs=pl.BlockSpec((b_block, H2, W2 * Cout), lambda n: (n, 0, 0)),
            scratch_shapes=[
                pltpu.VMEM((b_block, Hp, Wp * Cin), jnp.bfloat16),
                pltpu.VMEM((b_block, H1p, W1p * Cout), jnp.bfloat16),
            ],
        ),
        compiler_params=pltpu.CompilerParams(
            dimension_semantics=("parallel",),
            # Tiny blocks here; raise toward ~half of physical VMEM (and
            # re-derive for v7x's 64 MiB) once spatial tiling exists.
            vmem_limit_bytes=32 * 1024 * 1024,
        ),
    )(x_folded, shift_tiled, wb1, wb2)

    # Unfold lanes and return NCHW to match the PyTorch module's layout.
    out = out_folded.reshape(N, H2, W2, Cout)
    return jnp.transpose(out, (0, 3, 1, 2))


def _reference(x, bn_gamma, bn_beta, bn_mean, bn_var,
               w1_3x3, w1_1x1, w2_3x3, w2_1x1, *, padding=1):
    """Pure-JAX f32 reference with PyTorch semantics (eval-mode BN)."""
    inv_std = (bn_gamma / jnp.sqrt(bn_var + _BN_EPS))[None, :, None, None]
    xbn = (x - bn_mean[None, :, None, None]) * inv_std + bn_beta[None, :, None, None]

    def conv(z, w, pad):
        dn = lax.conv_dimension_numbers(z.shape, w.shape, ("NCHW", "OIHW", "NCHW"))
        return lax.conv_general_dilated(
            z, w, window_strides=(1, 1),
            padding=[(pad, pad), (pad, pad)], dimension_numbers=dn)

    y = conv(conv(xbn, w1_3x3, padding), w1_1x1, 0)
    y = jnp.where(y >= 0, y, _LEAKY_SLOPE * y)
    y = conv(conv(y, w2_3x3, padding), w2_1x1, 0)
    return jnp.where(y >= 0, y, _LEAKY_SLOPE * y)


if __name__ == "__main__":
    N, Cin, Cout, H, W = 2, 4, 8, 16, 16
    K, padding = 3, 1

    key = jax.random.PRNGKey(0)
    ks = jax.random.split(key, 9)

    x = jax.random.normal(ks[0], (N, Cin, H, W), dtype=jnp.float32)

    # BatchNorm2d parameters / running statistics (inference mode).
    bn_gamma = jax.random.uniform(ks[1], (Cin,), jnp.float32, 0.5, 1.5)
    bn_beta = 0.1 * jax.random.normal(ks[2], (Cin,), jnp.float32)
    bn_mean = 0.1 * jax.random.normal(ks[3], (Cin,), jnp.float32)
    bn_var = jax.random.uniform(ks[4], (Cin,), jnp.float32, 0.5, 1.5)

    def conv_w(k, o, i, kh, kw):
        fan = i * kh * kw
        return jax.random.uniform(k, (o, i, kh, kw), jnp.float32,
                                  -1.0, 1.0) / jnp.sqrt(fan)

    # DSConv2d #1: 3x3 (Cin->Cin) then 1x1 (Cin->Cout); #2: Cout->Cout.
    w1_3x3 = conv_w(ks[5], Cin, Cin, K, K)
    w1_1x1 = conv_w(ks[6], Cout, Cin, 1, 1)
    w2_3x3 = conv_w(ks[7], Cout, Cout, K, K)
    w2_1x1 = conv_w(ks[8], Cout, Cout, 1, 1)

    fwd = jax.jit(functools.partial(decoder_block, padding=padding))
    out = jax.block_until_ready(fwd(x, bn_gamma, bn_beta, bn_mean, bn_var,
                                    w1_3x3, w1_1x1, w2_3x3, w2_1x1))

    ref = _reference(x, bn_gamma, bn_beta, bn_mean, bn_var,
                     w1_3x3, w1_1x1, w2_3x3, w2_1x1, padding=padding)

    assert out.shape == ref.shape, (out.shape, ref.shape)
    # bf16 MXU operands vs f32 reference -> check relative L2 + max-abs error.
    rel_l2 = jnp.sqrt(jnp.sum((out - ref) ** 2) / jnp.sum(ref ** 2))
    max_abs = jnp.max(jnp.abs(out - ref))
    assert float(rel_l2) < 2e-2, float(rel_l2)
    assert float(max_abs) < 1e-1, float(max_abs)

    print("KERNEL_OK")
</pallas_src>

<mosaic_0001>
module attributes {stable_mosaic.version = 11 : i64} {
  func.func @_decoder_block_kernel(%arg0: i32, %arg1: memref<1x16x64xf32, #tpu.memory_space<vmem>>, %arg2: memref<1x1x64xf32, #tpu.memory_space<vmem>>, %arg3: memref<3x72x128xbf16, #tpu.memory_space<vmem>>, %arg4: memref<3x144x128xbf16, #tpu.memory_space<vmem>>, %arg5: memref<1x16x128xf32, #tpu.memory_space<vmem>>, %arg6: memref<1x18x72xbf16, #tpu.memory_space<vmem>>, %arg7: memref<1x18x144xbf16, #tpu.memory_space<vmem>>) attributes {dimension_semantics = [#tpu.dimension_semantics<parallel>], iteration_bounds = array<i64: 2>, scalar_prefetch = 0 : i64, scratch_operands = 2 : i64, tpu.core_type = #tpu.core_type<tc>, window_params = [{transform_indices = @transform_0, window_bounds = array<i64: 1, 16, 64>}, {pipeline_mode = #tpu.pipeline_mode<synchronous>, transform_indices = @transform_1, window_bounds = array<i64: 1, 1, 64>}, {pipeline_mode = #tpu.pipeline_mode<synchronous>, transform_indices = @transform_2, window_bounds = array<i64: 3, 72, 128>}, {pipeline_mode = #tpu.pipeline_mode<synchronous>, transform_indices = @transform_3, window_bounds = array<i64: 3, 144, 128>}, {transform_indices = @transform_4, window_bounds = array<i64: 1, 16, 128>}]} {
    %cst = arith.constant 0.000000e+00 : bf16
    %0 = vector.broadcast %cst : bf16 to vector<1x18x72xbf16>
    %c0 = arith.constant 0 : index
    %c0_0 = arith.constant 0 : index
    %c0_1 = arith.constant 0 : index
    %1 = vector.load %arg6[%c0, %c0_0, %c0_1] : memref<1x18x72xbf16, #tpu.memory_space<vmem>>, vector<1x18x72xbf16>
    tpu.vector_store %arg6[%c0, %c0_0, %c0_1], %0 {strides = array<i32>} : memref<1x18x72xbf16, #tpu.memory_space<vmem>>, vector<1x18x72xbf16>,
    %cst_2 = arith.constant 0.000000e+00 : bf16
    %2 = vector.broadcast %cst_2 : bf16 to vector<1x18x144xbf16>
    %c0_3 = arith.constant 0 : index
    %c0_4 = arith.constant 0 : index
    %c0_5 = arith.constant 0 : index
    %3 = vector.load %arg7[%c0_3, %c0_4, %c0_5] : memref<1x18x144xbf16, #tpu.memory_space<vmem>>, vector<1x18x144xbf16>
    tpu.vector_store %arg7[%c0_3, %c0_4, %c0_5], %2 {strides = array<i32>} : memref<1x18x144xbf16, #tpu.memory_space<vmem>>, vector<1x18x144xbf16>,
    %c0_6 = arith.constant 0 : index
    %c0_7 = arith.constant 0 : index
    %c0_8 = arith.constant 0 : index
    %4 = vector.load %arg1[%c0_6, %c0_7, %c0_8] : memref<1x16x64xf32, #tpu.memory_space<vmem>>, vector<1x16x64xf32>
    %c0_9 = arith.constant 0 : index
    %c0_10 = arith.constant 0 : index
    %c0_11 = arith.constant 0 : index
    %5 = vector.load %arg2[%c0_9, %c0_10, %c0_11] : memref<1x1x64xf32, #tpu.memory_space<vmem>>, vector<1x1x64xf32>
    %6 = vector.broadcast %5 : vector<1x1x64xf32> to vector<1x16x64xf32>
    %7 = arith.addf %4, %6 : vector<1x16x64xf32>
    %8 = arith.truncf %7 : vector<1x16x64xf32> to vector<1x16x64xbf16>
    %c0_12 = arith.constant 0 : index
    %c1 = arith.constant 1 : index
    %c4 = arith.constant 4 : index
    %9 = vector.load %arg6[%c0_12, %c1, %c4] : memref<1x18x72xbf16, #tpu.memory_space<vmem>>, vector<1x16x64xbf16>
    tpu.vector_store %arg6[%c0_12, %c1, %c4], %8 {strides = array<i32>} : memref<1x18x72xbf16, #tpu.memory_space<vmem>>, vector<1x16x64xbf16>,
    %cst_13 = arith.constant 0.000000e+00 : f32
    %10 = vector.broadcast %cst_13 : f32 to vector<16x128xf32>
    %c0_14 = arith.constant 0 : index
    %c0_15 = arith.constant 0 : index
    %c0_16 = arith.constant 0 : index
    %11 = vector.load %arg6[%c0_14, %c0_15, %c0_16] : memref<1x18x72xbf16, #tpu.memory_space<vmem>>, vector<1x16x72xbf16>
    %12 = vector.shape_cast %11 : vector<1x16x72xbf16> to vector<16x72xbf16>
    %c0_17 = arith.constant 0 : index
    %c0_18 = arith.constant 0 : index
    %c0_19 = arith.constant 0 : index
    %13 = vector.load %arg3[%c0_17, %c0_18, %c0_19] : memref<3x72x128xbf16, #tpu.memory_space<vmem>>, vector<1x72x128xbf16>
    %14 = vector.shape_cast %13 : vector<1x72x128xbf16> to vector<72x128xbf16>
    %cst_20 = arith.constant dense<0.000000e+00> : vector<16x128xf32>
    %15 = tpu.matmul %12, %14, %cst_20 {dimension_numbers = #tpu.dot_dimension_numbers<[1], [0], [0], [1], [0, 0, 1, 1], [], []>} : vector<16x72xbf16>, vector<72x128xbf16>, vector<16x128xf32> -> vector<16x128xf32>
    %16 = arith.addf %10, %15 : vector<16x128xf32>
    %c0_21 = arith.constant 0 : index
    %c1_22 = arith.constant 1 : index
    %c0_23 = arith.constant 0 : index
    %17 = vector.load %arg6[%c0_21, %c1_22, %c0_23] : memref<1x18x72xbf16, #tpu.memory_space<vmem>>, vector<1x16x72xbf16>
    %18 = vector.shape_cast %17 : vector<1x16x72xbf16> to vector<16x72xbf16>
    %c1_24 = arith.constant 1 : index
    %c0_25 = arith.constant 0 : index
    %c0_26 = arith.constant 0 : index
    %19 = vector.load %arg3[%c1_24, %c0_25, %c0_26] : memref<3x72x128xbf16, #tpu.memory_space<vmem>>, vector<1x72x128xbf16>
    %20 = vector.shape_cast %19 : vector<1x72x128xbf16> to vector<72x128xbf16>
    %cst_27 = arith.constant dense<0.000000e+00> : vector<16x128xf32>
    %21 = tpu.matmul %18, %20, %cst_27 {dimension_numbers = #tpu.dot_dimension_numbers<[1], [0], [0], [1], [0, 0, 1, 1], [], []>} : vector<16x72xbf16>, vector<72x128xbf16>, vector<16x128xf32> -> vector<16x128xf32>
    %22 = arith.addf %16, %21 : vector<16x128xf32>
    %c0_28 = arith.constant 0 : index
    %c2 = arith.constant 2 : index
    %c0_29 = arith.constant 0 : index
    %23 = vector.load %arg6[%c0_28, %c2, %c0_29] : memref<1x18x72xbf16, #tpu.memory_space<vmem>>, vector<1x16x72xbf16>
    %24 = vector.shape_cast %23 : vector<1x16x72xbf16> to vector<16x72xbf16>
    %c2_30 = arith.constant 2 : index
    %c0_31 = arith.constant 0 : index
    %c0_32 = arith.constant 0 : index
    %25 = vector.load %arg3[%c2_30, %c0_31, %c0_32] : memref<3x72x128xbf16, #tpu.memory_space<vmem>>, vector<1x72x128xbf16>
    %26 = vector.shape_cast %25 : vector<1x72x128xbf16> to vector<72x128xbf16>
    %cst_33 = arith.constant dense<0.000000e+00> : vector<16x128xf32>
    %27 = tpu.matmul %24, %26, %cst_33 {dimension_numbers = #tpu.dot_dimension_numbers<[1], [0], [0], [1], [0, 0, 1, 1], [], []>} : vector<16x72xbf16>, vector<72x128xbf16>, vector<16x128xf32> -> vector<16x128xf32>
    %28 = arith.addf %22, %27 : vector<16x128xf32>
    %cst_34 = arith.constant 0.00999999977 : f32
    %29 = vector.broadcast %cst_34 : f32 to vector<16x128xf32>
    %30 = arith.mulf %29, %28 : vector<16x128xf32>
    %31 = arith.maximumf %28, %30 : vector<16x128xf32>
    %32 = vector.shape_cast %31 : vector<16x128xf32> to vector<1x16x128xf32>
    %33 = arith.truncf %32 : vector<1x16x128xf32> to vector<1x16x128xbf16>
    %c0_35 = arith.constant 0 : index
    %c1_36 = arith.constant 1 : index
    %c8 = arith.constant 8 : index
    %34 = vector.load %arg7[%c0_35, %c1_36, %c8] : memref<1x18x144xbf16, #tpu.memory_space<vmem>>, vector<1x16x128xbf16>
    tpu.vector_store %arg7[%c0_35, %c1_36, %c8], %33 {strides = array<i32>} : memref<1x18x144xbf16, #tpu.memory_space<vmem>>, vector<1x16x128xbf16>,
    %cst_37 = arith.constant 0.000000e+00 : f32
    %35 = vector.broadcast %cst_37 : f32 to vector<16x128xf32>
    %c0_38 = arith.constant 0 : index
    %c0_39 = arith.constant 0 : index
    %c0_40 = arith.constant 0 : index
    %36 = vector.load %arg7[%c0_38, %c0_39, %c0_40] : memref<1x18x144xbf16, #tpu.memory_space<vmem>>, vector<1x16x144xbf16>
    %37 = vector.shape_cast %36 : vector<1x16x144xbf16> to vector<16x144xbf16>
    %c0_41 = arith.constant 0 : index
    %c0_42 = arith.constant 0 : index
    %c0_43 = arith.constant 0 : index
    %38 = vector.load %arg4[%c0_41, %c0_42, %c0_43] : memref<3x144x128xbf16, #tpu.memory_space<vmem>>, vector<1x144x128xbf16>
    %39 = vector.shape_cast %38 : vector<1x144x128xbf16> to vector<144x128xbf16>
    %cst_44 = arith.constant dense<0.000000e+00> : vector<16x128xf32>
    %40 = tpu.matmul %37, %39, %cst_44 {dimension_numbers = #tpu.dot_dimension_numbers<[1], [0], [0], [1], [0, 0, 1, 1], [], []>} : vector<16x144xbf16>, vector<144x128xbf16>, vector<16x128xf32> -> vector<16x128xf32>
    %41 = arith.addf %35, %40 : vector<16x128xf32>
    %c0_45 = arith.constant 0 : index
    %c1_46 = arith.constant 1 : index
    %c0_47 = arith.constant 0 : index
    %42 = vector.load %arg7[%c0_45, %c1_46, %c0_47] : memref<1x18x144xbf16, #tpu.memory_space<vmem>>, vector<1x16x144xbf16>
    %43 = vector.shape_cast %42 : vector<1x16x144xbf16> to vector<16x144xbf16>
    %c1_48 = arith.constant 1 : index
    %c0_49 = arith.constant 0 : index
    %c0_50 = arith.constant 0 : index
    %44 = vector.load %arg4[%c1_48, %c0_49, %c0_50] : memref<3x144x128xbf16, #tpu.memory_space<vmem>>, vector<1x144x128xbf16>
    %45 = vector.shape_cast %44 : vector<1x144x128xbf16> to vector<144x128xbf16>
    %cst_51 = arith.constant dense<0.000000e+00> : vector<16x128xf32>
    %46 = tpu.matmul %43, %45, %cst_51 {dimension_numbers = #tpu.dot_dimension_numbers<[1], [0], [0], [1], [0, 0, 1, 1], [], []>} : vector<16x144xbf16>, vector<144x128xbf16>, vector<16x128xf32> -> vector<16x128xf32>
    %47 = arith.addf %41, %46 : vector<16x128xf32>
    %c0_52 = arith.constant 0 : index
    %c2_53 = arith.constant 2 : index
    %c0_54 = arith.constant 0 : index
    %48 = vector.load %arg7[%c0_52, %c2_53, %c0_54] : memref<1x18x144xbf16, #tpu.memory_space<vmem>>, vector<1x16x144xbf16>
    %49 = vector.shape_cast %48 : vector<1x16x144xbf16> to vector<16x144xbf16>
    %c2_55 = arith.constant 2 : index
    %c0_56 = arith.constant 0 : index
    %c0_57 = arith.constant 0 : index
    %50 = vector.load %arg4[%c2_55, %c0_56, %c0_57] : memref<3x144x128xbf16, #tpu.memory_space<vmem>>, vector<1x144x128xbf16>
    %51 = vector.shape_cast %50 : vector<1x144x128xbf16> to vector<144x128xbf16>
    %cst_58 = arith.constant dense<0.000000e+00> : vector<16x128xf32>
    %52 = tpu.matmul %49, %51, %cst_58 {dimension_numbers = #tpu.dot_dimension_numbers<[1], [0], [0], [1], [0, 0, 1, 1], [], []>} : vector<16x144xbf16>, vector<144x128xbf16>, vector<16x128xf32> -> vector<16x128xf32>
    %53 = arith.addf %47, %52 : vector<16x128xf32>
    %cst_59 = arith.constant 0.00999999977 : f32
    %54 = vector.broadcast %cst_59 : f32 to vector<16x128xf32>
    %55 = arith.mulf %54, %53 : vector<16x128xf32>
    %56 = arith.maximumf %53, %55 : vector<16x128xf32>
    %57 = vector.shape_cast %56 : vector<16x128xf32> to vector<1x16x128xf32>
    %c0_60 = arith.constant 0 : index
    %c0_61 = arith.constant 0 : index
    %c0_62 = arith.constant 0 : index
    %58 = vector.load %arg5[%c0_60, %c0_61, %c0_62] : memref<1x16x128xf32, #tpu.memory_space<vmem>>, vector<1x16x128xf32>
    tpu.vector_store %arg5[%c0_60, %c0_61, %c0_62], %57 {strides = array<i32>} : memref<1x16x128xf32, #tpu.memory_space<vmem>>, vector<1x16x128xf32>,
    return
  }
  func.func @transform_0(%arg0: i32) -> (i32, i32, i32) {
    %c0_i32 = arith.constant 0 : i32
    %c0_i32_0 = arith.constant 0 : i32
    %c0_i32_1 = arith.constant 0 : i32
    return %arg0, %c0_i32, %c0_i32_0 : i32, i32, i32
  }
  func.func @transform_1(%arg0: i32) -> (i32, i32, i32) {
    %c0_i32 = arith.constant 0 : i32
    %c0_i32_0 = arith.constant 0 : i32
    %c0_i32_1 = arith.constant 0 : i32
    %c0_i32_2 = arith.constant 0 : i32
    return %c0_i32, %c0_i32_0, %c0_i32_1 : i32, i32, i32
  }
  func.func @transform_2(%arg0: i32) -> (i32, i32, i32) {
    %c0_i32 = arith.constant 0 : i32
    %c0_i32_0 = arith.constant 0 : i32
    %c0_i32_1 = arith.constant 0 : i32
    %c0_i32_2 = arith.constant 0 : i32
    return %c0_i32, %c0_i32_0, %c0_i32_1 : i32, i32, i32
  }
  func.func @transform_3(%arg0: i32) -> (i32, i32, i32) {
    %c0_i32 = arith.constant 0 : i32
    %c0_i32_0 = arith.constant 0 : i32
    %c0_i32_1 = arith.constant 0 : i32
    %c0_i32_2 = arith.constant 0 : i32
    return %c0_i32, %c0_i32_0, %c0_i32_1 : i32, i32, i32
  }
  func.func @transform_4(%arg0: i32) -> (i32, i32, i32) {
    %c0_i32 = arith.constant 0 : i32
    %c0_i32_0 = arith.constant 0 : i32
    %c0_i32_1 = arith.constant 0 : i32
    return %arg0, %c0_i32, %c0_i32_0 : i32, i32, i32
  }
}

</mosaic_0001>

<llo_original>
// kernel: tile.8
$region0: #{tile.8}
  #allocation0 [shape = 's32[1]{0}', space=sflag, size = 0x4, scoped, tag = 'scoped memory for tile.8']
  %s0 = inlined_call_operand.vmem [shape: f32[4], index: 0, kind: input, shape index: {}]
  %s1 = inlined_call_operand.vmem [shape: f32[16,4], index: 1, kind: output, shape index: {}]
  // Predicated region
  $region2: #{tile.8} parent=0 // pred_check
    _
  $region3: #{tile.8} parent=0 // pred_check_branch
    %3 = sbr.rel (0) target = $region5
  $region4: #{tile.8} parent=0 // pred_region
    _
  $region5: #{tile.8} parent=0 // pred_fallthru
    _
  %v4 = vld [vmem:[%s0] ss:$0 sm:$0xff]
  %5 = vst [vmem:[%s1] sm:$0xff] %v4
  %s6 = scalar_lea.vmem %s1, 8
  %7 = vst [vmem:[%s6] sm:$0xff] %v4

// kernel: tile.9
$region0: #{tile.9}
  %s0 = inlined_call_operand.vmem [shape: f32[16,4], index: 0, kind: input, shape index: {}]
  %s1 = inlined_call_operand.vmem [shape: f32[1,1,64], index: 1, kind: output, shape index: {}]
  $region1: #{tile.9} parent=0
    #allocation0 [shape = 'u8[4096]{0}', space=vmem, size = 0x1000, scoped, tag = 'scoped mem for output reshape']
    %v2 = vld [vmem:[%s0] sm:$0x1]
    %vm3 = vcmask 31744
    %4 = vst.msk [vmem:[#allocation0] sm:$0x1] %vm3, %v2
    %s5 = scalar_lea.vmem %s0, 15
    %v6 = vld [vmem:[%s5] sm:$0x1]
    %7 = vrot.lane.b32.xlu0 %v6, 60
    %v8 = vpop.permute.xlu0 %7
    %vm9 = vcmask 523744
    %10 = vst.msk [vmem:[#allocation0] sm:$0x1] %vm9, %v8
    %s11 = scalar_lea.vmem %s0, 14
    %v12 = vld [vmem:[%s11] sm:$0x1]
    %13 = vrot.lane.b32.xlu0 %v12, 56
    %v14 = vpop.permute.xlu0 %13
    %vm15 = vcmask 490944
    %16 = vst.msk [vmem:[#allocation0] sm:$0x1] %vm15, %v14
    %s17 = scalar_lea.vmem %s0, 13
    %v18 = vld [vmem:[%s17] sm:$0x1]
    %19 = vrot.lane.b32.xlu0 %v18, 52
    %v20 = vpop.permute.xlu0 %19
    %vm21 = vcmask 458144
    %22 = vst.msk [vmem:[#allocation0] sm:$0x1] %vm21, %v20
    %s23 = scalar_lea.vmem %s0, 12
    %v24 = vld [vmem:[%s23] sm:$0x1]
    %25 = vrot.lane.b32.xlu0 %v24, 48
    %v26 = vpop.permute.xlu0 %25
    %vm27 = vcmask 425344
    %28 = vst.msk [vmem:[#allocation0] sm:$0x1] %vm27, %v26
    %s29 = scalar_lea.vmem %s0, 11
    %v30 = vld [vmem:[%s29] sm:$0x1]
    %31 = vrot.lane.b32.xlu0 %v30, 44
    %v32 = vpop.permute.xlu0 %31
    %vm33 = vcmask 392544
    %34 = vst.msk [vmem:[#allocation0] sm:$0x1] %vm33, %v32
    %s35 = scalar_lea.vmem %s0, 10
    %v36 = vld [vmem:[%s35] sm:$0x1]
    %37 = vrot.lane.b32.xlu0 %v36, 40
    %v38 = vpop.permute.xlu0 %37
    %vm39 = vcmask 359744
    %40 = vst.msk [vmem:[#allocation0] sm:$0x1] %vm39, %v38
    %s41 = scalar_lea.vmem %s0, 9
    %v42 = vld [vmem:[%s41] sm:$0x1]
    %43 = vrot.lane.b32.xlu0 %v42, 36
    %v44 = vpop.permute.xlu0 %43
    %vm45 = vcmask 326944
    %46 = vst.msk [vmem:[#allocation0] sm:$0x1] %vm45, %v44
    %s47 = scalar_lea.vmem %s0, 8
    %v48 = vld [vmem:[%s47] sm:$0x1]
    %49 = vrot.lane.b32.xlu0 %v48, 32
    %v50 = vpop.permute.xlu0 %49
    %vm51 = vcmask 294144
    %52 = vst.msk [vmem:[#allocation0] sm:$0x1] %vm51, %v50
    %s53 = scalar_lea.vmem %s0, 7
    %v54 = vld [vmem:[%s53] sm:$0x1]
    %55 = vrot.lane.b32.xlu0 %v54, 28
    %v56 = vpop.permute.xlu0 %55
    %vm57 = vcmask 261344
    %58 = vst.msk [vmem:[#allocation0] sm:$0x1] %vm57, %v56
    %s59 = scalar_lea.vmem %s0, 6
    %v60 = vld [vmem:[%s59] sm:$0x1]
    %61 = vrot.lane.b32.xlu0 %v60, 24
    %v62 = vpop.permute.xlu0 %61
    %vm63 = vcmask 228544
    %64 = vst.msk [vmem:[#allocation0] sm:$0x1] %vm63, %v62
    %s65 = scalar_lea.vmem %s0, 5
    %v66 = vld [vmem:[%s65] sm:$0x1]
    %67 = vrot.lane.b32.xlu0 %v66, 20
    %v68 = vpop.permute.xlu0 %67
    %vm69 = vcmask 195744
    %70 = vst.msk [vmem:[#allocation0] sm:$0x1] %vm69, %v68
    %s71 = scalar_lea.vmem %s0, 4
    %v72 = vld [vmem:[%s71] sm:$0x1]
    %73 = vrot.lane.b32.xlu0 %v72, 16
    %v74 = vpop.permute.xlu0 %73
    %vm75 = vcmask 162944
    %76 = vst.msk [vmem:[#allocation0] sm:$0x1] %vm75, %v74
    %s77 = scalar_lea.vmem %s0, 3
    %v78 = vld [vmem:[%s77] sm:$0x1]
    %79 = vrot.lane.b32.xlu0 %v78, 12
    %v80 = vpop.permute.xlu0 %79
    %vm81 = vcmask 130144
    %82 = vst.msk [vmem:[#allocation0] sm:$0x1] %vm81, %v80
    %s83 = scalar_lea.vmem %s0, 2
    %v84 = vld [vmem:[%s83] sm:$0x1]
    %85 = vrot.lane.b32.xlu0 %v84, 8
    %v86 = vpop.permute.xlu0 %85
    %vm87 = vcmask 97344
    %88 = vst.msk [vmem:[#allocation0] sm:$0x1] %vm87, %v86
    %s89 = scalar_lea.vmem %s0, 1
    %v90 = vld [vmem:[%s89] sm:$0x1]
    %91 = vrot.lane.b32.xlu0 %v90, 4
    %v92 = vpop.permute.xlu0 %91
    %vm93 = vcmask 64544
    %94 = vst.msk [vmem:[#allocation0] sm:$0x1] %vm93, %v92
    %s96 = sshll.u32 1, 1
    %s97 = ssub.s32 %s96, 1
    %v99 = vld [vmem:[#allocation0] sm:%s97]
    %s100 = sshll.u32 1, 1
    %s101 = ssub.s32 %s100, 1
    %102 = vst [vmem:[%s1] sm:%s101] %v99

// kernel: decoder_block.1
$region0: #{decoder_block.1}
  #allocation0 [shape = 'u32[]', space=smem, size = 0x4, offset = 0x4, fixed_abs, tag = 'smem constant byte address 0x4 - core index']
  #allocation1 [shape = 'u32[144,128]{1,0:T(1,128)}', space=vmem, size = 0x12000, scoped, tag = 'internal scratch']
  #allocation2 [shape = 'bf16[1,18,72]{2,1,0:T(8,128)(2,1)}', space=vmem, size = 0x1800, scoped, tag = 'scratch operand']
  #allocation3 [shape = 'bf16[1,18,144]{2,1,0:T(8,128)(2,1)}', space=vmem, size = 0x3000, scoped, tag = 'scratch operand']
  %s0 = inlined_call_operand.vmem [shape: f32[2,16,64], index: 0, kind: input, shape index: {}]
  %s1 = inlined_call_operand.vmem [shape: f32[1,1,64], index: 1, kind: input, shape index: {}]
  %s2 = inlined_call_operand.vmem [shape: bf16[3,72,128], index: 2, kind: input, shape index: {}]
  %s3 = inlined_call_operand.vmem [shape: bf16[3,144,128], index: 3, kind: input, shape index: {}]
  %s4 = inlined_call_operand.vmem [shape: f32[2,16,128], index: 4, kind: output, shape index: {}]
  %s5 = sld [smem:[#allocation0]]
  $region49: #{decoder_block.1} parent=0
    _
  %s7 = ssub.s32 1, %s5
  %s8 = scalar_select 0, %s7, %s5
  loop: start=0, step=1, limit=4
  $region2: #{decoder_block.1} parent=0 // loop_pre_header
    _
  $region3: #{decoder_block.1} parent=0 // loop_header
    %s10 = sphi 0, %s14
    %p11 = scmp.ge.s32.totalorder %s10, 4
    %s20 = sphi 0, %s22
    %s23 = sphi 0, %s20
    %s24 = sphi 0, %s23
    %s40 = sphi 0, %s24
    %s44 = sphi 0, %s44
    %s46 = sphi 0, %s44
    %s47 = sphi 0, %s46
    %s61 = sphi 0, %s47
    %s65 = sphi 0, %s65
    %s67 = sphi 0, %s65
    %s68 = sphi 0, %s67
    %s82 = sphi 0, %s68
    %s86 = sphi 0, %s86
    %s88 = sphi 0, %s86
    %s89 = sphi 0, %s88
    %s103 = sphi 0, %s89
    %s109 = sphi 0, %s111
    %s112 = sphi 0, %s109
    %s113 = sphi 0, %s112
    %s129 = sphi 0, %s113
  $region4: #{decoder_block.1} parent=0 // loop_header_branch
    %13 = sbr.rel (%p11) target = $region8
  $region5: #{decoder_block.1} parent=0 // loop_body
    %s15 = ssub.s32 %s10, 1
    %s16 = ssub.s32 %s10, 2
    %s17 = sadd.s32 %s10, 1
    %s18 = ssub.s32 %s10, %s17
    %p19 = scmp.eq.s32.totalorder %s18, 0
    %s21 = sadd.s32 %s20, 1
    %s22 = scalar_select %p19, %s20, %s21
    %p25 = pneg %p19
    %p26 = scmp.eq.s32.totalorder %s10, 1
    %p27 = por %p25, %p26
    %p28 = scmp.ne.s32.totalorder %s20, %s23
    %p29 = scmp.eq.s32.totalorder %s10, 0
    %p30 = por %p28, %p29
    %p31 = scmp.ne.s32.totalorder %s20, %s23
    %p32 = scmp.eq.s32.totalorder %s15, 1
    %p33 = por %p31, %p32
    %p34 = scmp.ne.s32.totalorder %s23, %s24
    %p35 = scmp.eq.s32.totalorder %s15, 0
    %p36 = por %p34, %p35
    %p37 = scmp.ne.s32.totalorder %s23, %s24
    %p38 = scmp.eq.s32.totalorder %s16, 1
    %p39 = por %p37, %p38
    %p41 = scmp.ne.s32.totalorder %s24, %s40
    %p42 = scmp.eq.s32.totalorder %s16, 0
    %p43 = por %p41, %p42
    %s45 = sadd.s32 %s44, 1
    %p48 = scmp.eq.s32.totalorder %s10, 1
    %p49 = scmp.ne.s32.totalorder %s44, %s46
    %p50 = scmp.eq.s32.totalorder %s10, 0
    %p51 = por %p49, %p50
    %p52 = scmp.ne.s32.totalorder %s44, %s46
    %p53 = scmp.eq.s32.totalorder %s15, 1
    %p54 = por %p52, %p53
    %p55 = scmp.ne.s32.totalorder %s46, %s47
    %p56 = scmp.eq.s32.totalorder %s15, 0
    %p57 = por %p55, %p56
    %p58 = scmp.ne.s32.totalorder %s46, %s47
    %p59 = scmp.eq.s32.totalorder %s16, 1
    %p60 = por %p58, %p59
    %p62 = scmp.ne.s32.totalorder %s47, %s61
    %p63 = scmp.eq.s32.totalorder %s16, 0
    %p64 = por %p62, %p63
    %s66 = sadd.s32 %s65, 1
    %p69 = scmp.eq.s32.totalorder %s10, 1
    %p70 = scmp.ne.s32.totalorder %s65, %s67
    %p71 = scmp.eq.s32.totalorder %s10, 0
    %p72 = por %p70, %p71
    %p73 = scmp.ne.s32.totalorder %s65, %s67
    %p74 = scmp.eq.s32.totalorder %s15, 1
    %p75 = por %p73, %p74
    %p76 = scmp.ne.s32.totalorder %s67, %s68
    %p77 = scmp.eq.s32.totalorder %s15, 0
    %p78 = por %p76, %p77
    %p79 = scmp.ne.s32.totalorder %s67, %s68
    %p80 = scmp.eq.s32.totalorder %s16, 1
    %p81 = por %p79, %p80
    %p83 = scmp.ne.s32.totalorder %s68, %s82
    %p84 = scmp.eq.s32.totalorder %s16, 0
    %p85 = por %p83, %p84
    %s87 = sadd.s32 %s86, 1
    %p90 = scmp.eq.s32.totalorder %s10, 1
    %p91 = scmp.ne.s32.totalorder %s86, %s88
    %p92 = scmp.eq.s32.totalorder %s10, 0
    %p93 = por %p91, %p92
    %p94 = scmp.ne.s32.totalorder %s86, %s88
    %p95 = scmp.eq.s32.totalorder %s15, 1
    %p96 = por %p94, %p95
    %p97 = scmp.ne.s32.totalorder %s88, %s89
    %p98 = scmp.eq.s32.totalorder %s15, 0
    %p99 = por %p97, %p98
    %p100 = scmp.ne.s32.totalorder %s88, %s89
    %p101 = scmp.eq.s32.totalorder %s16, 1
    %p102 = por %p100, %p101
    %p104 = scmp.ne.s32.totalorder %s89, %s103
    %p105 = scmp.eq.s32.totalorder %s16, 0
    %p106 = por %p104, %p105
    %s107 = ssub.s32 %s10, %s17
    %p108 = scmp.eq.s32.totalorder %s107, 0
    %s110 = sadd.s32 %s109, 1
    %s111 = scalar_select %p108, %s109, %s110
    %p114 = pneg %p108
    %p115 = scmp.eq.s32.totalorder %s10, 1
    %p116 = por %p114, %p115
    %p117 = scmp.ne.s32.totalorder %s109, %s112
    %p118 = scmp.eq.s32.totalorder %s10, 0
    %p119 = por %p117, %p118
    %p120 = scmp.ne.s32.totalorder %s109, %s112
    %p121 = scmp.eq.s32.totalorder %s15, 1
    %p122 = por %p120, %p121
    %p123 = scmp.ne.s32.totalorder %s112, %s113
    %p124 = scmp.eq.s32.totalorder %s15, 0
    %p125 = por %p123, %p124
    %p126 = scmp.ne.s32.totalorder %s112, %s113
    %p127 = scmp.eq.s32.totalorder %s16, 1
    %p128 = por %p126, %p127
    %p130 = scmp.ne.s32.totalorder %s113, %s129
    %p131 = scmp.eq.s32.totalorder %s16, 0
    %p132 = por %p130, %p131
    %p133 = scmp.le.s32.totalorder 1, %s10
    %p134 = scmp.lt.s32.totalorder %s10, 3
    %p135 = pnand %p133, %p134
    %p136 = pneg %p135
    // Predicated region
    $region9: #{decoder_block.1} parent=5 // pred_check
      _
    $region10: #{decoder_block.1} parent=5 // pred_check_branch
      %138 = sbr.rel (%p135) target = $region12
    $region11: #{decoder_block.1} parent=5 // pred_region
      %s139 = ssub.s32 %s10, 1
      // Predicated region
      $region13: #{decoder_block.1} parent=11 // pred_check
        %p140 = pneg %p57
      $region14: #{decoder_block.1} parent=11 // pred_check_branch
        %142 = sbr.rel (%p140) target = $region16
      $region15: #{decoder_block.1} parent=11 // pred_region
        _
      $region16: #{decoder_block.1} parent=11 // pred_fallthru
        _
      // Predicated region
      $region17: #{decoder_block.1} parent=11 // pred_check
        %p143 = pneg %p78
      $region18: #{decoder_block.1} parent=11 // pred_check_branch
        %145 = sbr.rel (%p143) target = $region20
      $region19: #{decoder_block.1} parent=11 // pred_region
        _
      $region20: #{decoder_block.1} parent=11 // pred_fallthru
        _
      // Predicated region
      $region21: #{decoder_block.1} parent=11 // pred_check
        %p146 = pneg %p99
      $region22: #{decoder_block.1} parent=11 // pred_check_branch
        %148 = sbr.rel (%p146) target = $region24
      $region23: #{decoder_block.1} parent=11 // pred_region
        _
      $region24: #{decoder_block.1} parent=11 // pred_fallthru
        _
    $region12: #{decoder_block.1} parent=5 // pred_fallthru
      _
    %p149 = scmp.lt.s32.totalorder %s10, 2
    // Predicated region
    $region25: #{decoder_block.1} parent=5 // pred_check
      %p150 = pneg %p149
    $region26: #{decoder_block.1} parent=5 // pred_check_branch
      %152 = sbr.rel (%p150) target = $region28
    $region27: #{decoder_block.1} parent=5 // pred_region
      // Predicated region
      $region29: #{decoder_block.1} parent=27 // pred_check
        %p153 = pneg %p30
      $region30: #{decoder_block.1} parent=27 // pred_check_branch
        %155 = sbr.rel (%p153) target = $region32
      $region31: #{decoder_block.1} parent=27 // pred_region
        %p156 = scmp.lt.s32.totalorder %s10, 1
        %s157 = scalar_select %p156, %s10, 1
        %s158 = smul.addr %s157, 2
        %s159 = smul.addr %s158, 8
        %s160 = scalar_lea.vmem %s0, %s159
      $region32: #{decoder_block.1} parent=27 // pred_fallthru
        _
    $region28: #{decoder_block.1} parent=5 // pred_fallthru
      _
    %p161 = scmp.le.s32.totalorder 1, %s10
    %p162 = scmp.lt.s32.totalorder %s10, 3
    %p163 = pnand %p161, %p162
    %p164 = pneg %p163
    // Predicated region
    $region33: #{decoder_block.1} parent=5 // pred_check
      _
    $region34: #{decoder_block.1} parent=5 // pred_check_branch
      %166 = sbr.rel (%p163) target = $region36
    $region35: #{decoder_block.1} parent=5 // pred_region
      %s167 = ssub.s32 %s10, 1
      %p168 = scmp.lt.s32.totalorder %s15, 1
      %s169 = scalar_select %p168, %s15, 1
      %s170 = smul.addr %s169, 2
      %s171 = smul.addr %s170, 8
      %s172 = scalar_lea.vmem %s0, %s171
      %p173 = pneg %p36
      %p174 = pneg %p33
      %p175 = pneg %p57
      %p176 = pneg %p54
      %p177 = pneg %p78
      %p178 = pneg %p75
      %p179 = pneg %p99
      %p180 = pneg %p96
      %p181 = pneg %p125
      %p182 = pneg %p122
      %p183 = scmp.lt.s32.totalorder %s15, 1
      %s184 = scalar_select %p183, %s15, 1
      %s185 = smul.addr %s184, 2
      %s186 = smul.addr %s185, 8
      %s187 = scalar_lea.vmem %s4, %s186
      %p188 = scmp.lt.s32.totalorder %s15, 1
      %s189 = scalar_select %p188, %s15, 1
      %s190 = smul.addr %s189, 2
      %s191 = smul.addr %s190, 8
      %s192 = scalar_lea.vmem %s0, %s191
      %p193 = scmp.lt.s32.totalorder %s15, 1
      %s194 = scalar_select %p193, %s15, 1
      %s195 = smul.addr %s194, 2
      %s196 = smul.addr %s195, 8
      %s197 = scalar_lea.vmem %s4, %s196
      %vm199 = vcmask 584704
      %200 = vst.msk [vmem:[#allocation2] sm:$0xf] %vm199, 0
      %201 = vst.msk [vmem:[#allocation2 + $0x4] sm:$0xf] %vm199, 0
      %vm202 = vcmask 581632
      %203 = vst.msk [vmem:[#allocation2 + $0x8] sm:$0x1] %vm202, 0
      %vm204 = vcmask 1043456
      %vm205 = vcmask 130052
      %vm206 = vmor %vm205, %vm204
      %207 = vst.msk [vmem:[#allocation3] sm:$0xff] %vm206, 0
      %208 = vst.msk [vmem:[#allocation3 + $0x8] sm:$0xff] %vm206, 0
      %vm209 = vcmask 1040384
      %vm210 = vcmask 126980
      %vm211 = vmor %vm210, %vm209
      %212 = vst.msk [vmem:[#allocation3 + $0x10] sm:$0x11] %vm211, 0
      %v213 = vld [vmem:[%s192] sm:$0xff]
      %v214 = vld [vmem:[%s192 + $0x8] sm:$0xff]
      %v215 = vld [vmem:[%s1] sm:$0x1]
      %v217 = vlaneseq
      %v218 = vshrl.u32 %v217, 7
      %v219 = vsub.s32 0, %v218
      %v220 = vrot.slane %v215, %v219
      %v222 = vadd.f32 %v213, %v220
      %v223 = vadd.f32 %v214, %v220
      %v224 = vpack.c.bf16 %v223, %v222
      %v226 = vunpack.c.l.b16 %v224
      %v227 = vunpack.c.h.b16 %v224
      %v228 = vpack.c.b16 %v226, %v226
      %v229 = vpack.c.b16 %v227, %v227
      %vm230 = vsmask.f32 256
      %vm231 = vsmask.f32 4368
      %vm232 = vmor %vm230, %vm231
      %v234 = vshrl.u32 %v228, 16
      %v236 = vrot.slane %v234, 7
      %v237 = vshll.u32 %v228, 16
      %v239 = vor.u32 %v236, %v237
      %v240 = vrot.slane %v236, 4
      %v242 = vshrl.u32 %v229, 16
      %v244 = vrot.slane %v242, 7
      %v245 = vshll.u32 %v229, 16
      %v247 = vor.u32 %v244, %v245
      %v248 = vsel %vm232, %v240, %v247
      %v249 = vrot.slane %v244, 4
      %250 = vrot.lane.b32.xlu0 %v239, 4
      %v251 = vpop.permute.xlu0 %250
      %252 = vrot.lane.b32.xlu0 %v248, 4
      %v253 = vpop.permute.xlu0 %252
      %254 = vrot.lane.b32.xlu0 %v249, 4
      %v255 = vpop.permute.xlu0 %254
      %vm259 = vcmask 551968
      %vm260 = vsmask.f32 7938
      %vm261 = vmand %vm259, %vm260
      %v262 = vld [vmem:[#allocation2] sm:$0xf]
      %v263 = vsel %vm261, %v251, %v262
      %264 = vst [vmem:[#allocation2] sm:$0xf] %v263
      %vm265 = vcmask 551968
      %266 = vst.msk [vmem:[#allocation2 + $0x4] sm:$0xf] %vm265, %v253
      %vm267 = vcmask 548896
      %vm268 = vmand %vm267, %vm230
      %v269 = vld [vmem:[#allocation2 + $0x8] sm:$0x1]
      %v270 = vsel %vm268, %v255, %v269
      %271 = vst [vmem:[#allocation2 + $0x8] sm:$0x1] %v270
      %v272 = vld [vmem:[#allocation2] sm:$0xf]
      %v273 = vld [vmem:[#allocation2 + $0x4] sm:$0xf]
      %v274 = vld [vmem:[%s2] sm:$0xf]
      %v275 = vld [vmem:[%s2 + $0x4] sm:$0xf]
      %v276 = vld [vmem:[%s2 + $0x8] sm:$0xf]
      %v277 = vld [vmem:[%s2 + $0xc] sm:$0xf]
      %v278 = vld [vmem:[%s2 + $0x10] sm:$0xf]
      %v279 = vld [vmem:[%s2 + $0x14] sm:$0xf]
      %v280 = vld [vmem:[%s2 + $0x18] sm:$0xf]
      %v281 = vld [vmem:[%s2 + $0x1c] sm:$0xf]
      %v282 = vld [vmem:[%s2 + $0x20] sm:$0xf]
      %v283 = vld [vmem:[#allocation2 + $0x8] sm:$0x1]
      %s284 = scalar_lea.vmem %s2, 36
      %v285 = vld [vmem:[%s284] sm:$0xf]
      %v286 = vld [vmem:[%s284 + $0x4] sm:$0xf]
      %v287 = vld [vmem:[%s284 + $0x8] sm:$0xf]
      %v288 = vld [vmem:[%s284 + $0xc] sm:$0xf]
      %v289 = vld [vmem:[%s284 + $0x10] sm:$0xf]
      %v290 = vld [vmem:[%s284 + $0x14] sm:$0xf]
      %v291 = vld [vmem:[%s284 + $0x18] sm:$0xf]
      %v292 = vld [vmem:[%s284 + $0x1c] sm:$0xf]
      %v293 = vld [vmem:[%s284 + $0x20] sm:$0xf]
      %v297 = vunpack.c.l.b16 %v272
      %v298 = vunpack.c.l.b16 %v273
      %v299 = vunpack.c.l.b16 %v283
      %v300 = vpack.c.b16 %v298, %v297
      %v301 = vpack.c.b16 %v299, %v299
      %vm302 = vsmask.f32 7424
      %v304 = vshrl.u32 %v300, 16
      %v306 = vshll.u32 %v300, 16
      %v308 = vrot.slane %v306, 1
      %v309 = vor.u32 %v304, %v308
      %v311 = vshll.u32 %v301, 16
      %v313 = vrot.slane %v311, 1
      %v314 = vsel %vm302, %v309, %v313
      %v324 = vunpack.c.l.b16 %v285
      %v325 = vunpack.c.l.b16 %v286
      %v326 = vunpack.c.l.b16 %v287
      %v327 = vunpack.c.l.b16 %v288
      %v328 = vunpack.c.l.b16 %v289
      %v329 = vunpack.c.l.b16 %v290
      %v330 = vunpack.c.l.b16 %v291
      %v331 = vunpack.c.l.b16 %v292
      %v332 = vunpack.c.l.b16 %v293
      %v333 = vpack.c.b16 %v325, %v324
      %v334 = vpack.c.b16 %v327, %v326
      %v335 = vpack.c.b16 %v329, %v328
      %v336 = vpack.c.b16 %v331, %v330
      %v337 = vpack.c.b16 %v332, %v332
      %vm342 = vcmask 588800
      %v344 = vsel %vm342, %v314, 0
      %v347 = vsel %vm204, %v337, 0
      %349 = vmatprep.subr.bf16.mxu0 0
      %350 = vmatpush1.bf16.msra.mxu0 0
      %351 = vmatprep.subr.bf16.mxu0 0
      %352 = vmatpush1.bf16.msra.mxu0 0
      %353 = vmatprep.subr.bf16.mxu0 0
      %354 = vmatpush1.bf16.msra.mxu0 0
      %355 = vmatprep.subr.bf16.mxu0 0
      %356 = vmatpush1.bf16.msra.mxu0 %v347
      %357 = vmatprep.subr.bf16.mxu0 0
      %358 = vmatpush1.bf16.msra.mxu0 %v336
      %359 = vmatprep.subr.bf16.mxu0 0
      %360 = vmatpush1.bf16.msra.mxu0 %v335
      %361 = vmatprep.subr.bf16.mxu0 0
      %362 = vmatpush1.bf16.msra.mxu0 %v334
      %363 = vmatprep.subr.bf16.mxu0 0
      %364 = vmatpush1.bf16.msra.mxu0 %v333
      %365 = vmatprep.subr.bf16.mxu0 0
      %366 = vmatpush2.bf16.msra.mxu0 0
      %367 = vmatprep.subr.bf16.mxu0 0
      %368 = vmatpush2.bf16.msra.mxu0 0
      %369 = vmatprep.subr.bf16.mxu0 0
      %370 = vmatpush2.bf16.msra.mxu0 0
      %371 = vmatprep.subr.bf16.mxu0 0
      %372 = vmatpush2.bf16.msra.mxu0 0
      %373 = vmatprep.subr.bf16.mxu0 0
      %374 = vmatpush2.bf16.msra.mxu0 0
      %375 = vmatprep.subr.bf16.mxu0 0
      %376 = vmatpush2.bf16.msra.mxu0 0
      %377 = vmatprep.subr.bf16.mxu0 0
      %378 = vmatpush2.bf16.msra.mxu0 0
      %379 = vmatprep.subr.bf16.mxu0 0
      %380 = vmatpush2.bf16.msra.mxu0 0
      %381 = vmatprep.mubr.bf16.mxu0 0
      %382 = vmatmul.mubr.bf16.gmra.mxu0 %v344
      %v383 = vpop.f32.mrf.mxu0
      %v384 = vadd.f32 0.0, %v383
      %v385 = vpop.f32.mrf.mxu0
      %v386 = vpop.f32.mrf.mxu0
      %v387 = vadd.f32 0.0, %v386
      %v388 = vpop.f32.mrf.mxu0
      %389 = vdwg.mxu0
      %v399 = vunpack.c.l.b16 %v274
      %v400 = vunpack.c.l.b16 %v275
      %v401 = vunpack.c.l.b16 %v276
      %v402 = vunpack.c.l.b16 %v277
      %v403 = vunpack.c.l.b16 %v278
      %v404 = vunpack.c.l.b16 %v279
      %v405 = vunpack.c.l.b16 %v280
      %v406 = vunpack.c.l.b16 %v281
      %v407 = vunpack.c.l.b16 %v282
      %v408 = vpack.c.b16 %v400, %v399
      %v409 = vpack.c.b16 %v402, %v401
      %v410 = vpack.c.b16 %v404, %v403
      %v411 = vpack.c.b16 %v406, %v405
      %v412 = vpack.c.b16 %v407, %v407
      %v417 = vsel %vm342, %v300, 0
      %v420 = vsel %vm204, %v412, 0
      %422 = vmatprep.subr.bf16.mxu0 0
      %423 = vmatpush1.bf16.msra.mxu0 0
      %424 = vmatprep.subr.bf16.mxu0 0
      %425 = vmatpush1.bf16.msra.mxu0 0
      %426 = vmatprep.subr.bf16.mxu0 0
      %427 = vmatpush1.bf16.msra.mxu0 0
      %428 = vmatprep.subr.bf16.mxu0 0
      %429 = vmatpush1.bf16.msra.mxu0 %v420
      %430 = vmatprep.subr.bf16.mxu0 0
      %431 = vmatpush1.bf16.msra.mxu0 %v411
      %432 = vmatprep.subr.bf16.mxu0 0
      %433 = vmatpush1.bf16.msra.mxu0 %v410
      %434 = vmatprep.subr.bf16.mxu0 0
      %435 = vmatpush1.bf16.msra.mxu0 %v409
      %436 = vmatprep.subr.bf16.mxu0 0
      %437 = vmatpush1.bf16.msra.mxu0 %v408
      %438 = vmatprep.subr.bf16.mxu0 0
      %439 = vmatpush2.bf16.msra.mxu0 0
      %440 = vmatprep.subr.bf16.mxu0 0
      %441 = vmatpush2.bf16.msra.mxu0 0
      %442 = vmatprep.subr.bf16.mxu0 0
      %443 = vmatpush2.bf16.msra.mxu0 0
      %444 = vmatprep.subr.bf16.mxu0 0
      %445 = vmatpush2.bf16.msra.mxu0 0
      %446 = vmatprep.subr.bf16.mxu0 0
      %447 = vmatpush2.bf16.msra.mxu0 0
      %448 = vmatprep.subr.bf16.mxu0 0
      %449 = vmatpush2.bf16.msra.mxu0 0
      %450 = vmatprep.subr.bf16.mxu0 0
      %451 = vmatpush2.bf16.msra.mxu0 0
      %452 = vmatprep.subr.bf16.mxu0 0
      %453 = vmatpush2.bf16.msra.mxu0 0
      %454 = vmatprep.mubr.bf16.mxu0 0
      %455 = vmatmul.mubr.bf16.gmra.mxu0 %v417
      %v456 = vpop.f32.mrf.mxu0
      %v457 = vadd.f32 %v384, %v456
      %v458 = vpop.f32.mrf.mxu0
      %v459 = vpop.f32.mrf.mxu0
      %v460 = vadd.f32 %v387, %v459
      %v461 = vpop.f32.mrf.mxu0
      %462 = vdwg.mxu0
      %v463 = vld [vmem:[#allocation2] sm:$0xe]
      %s464 = scalar_lea.vmem %s2, 72
      %v465 = vld [vmem:[%s464] sm:$0xf]
      %v466 = vld [vmem:[%s464 + $0x4] sm:$0xf]
      %v467 = vld [vmem:[%s464 + $0x8] sm:$0xf]
      %v468 = vld [vmem:[%s464 + $0xc] sm:$0xf]
      %v469 = vld [vmem:[%s464 + $0x10] sm:$0xf]
      %v470 = vld [vmem:[%s464 + $0x14] sm:$0xf]
      %v471 = vld [vmem:[%s464 + $0x18] sm:$0xf]
      %v472 = vld [vmem:[%s464 + $0x1c] sm:$0xf]
      %v473 = vld [vmem:[%s464 + $0x20] sm:$0xf]
      %v475 = vunpack.c.l.b16 %v463
      %v476 = vpack.c.b16 %v298, %v475
      %vm477 = vcmask 1046528
      %v478 = vrot.slane %v476, 1
      %v479 = vrot.slane %v301, 1
      %v480 = vsel %vm477, %v478, %v479
      %v490 = vunpack.c.l.b16 %v465
      %v491 = vunpack.c.l.b16 %v466
      %v492 = vunpack.c.l.b16 %v467
      %v493 = vunpack.c.l.b16 %v468
      %v494 = vunpack.c.l.b16 %v469
      %v495 = vunpack.c.l.b16 %v470
      %v496 = vunpack.c.l.b16 %v471
      %v497 = vunpack.c.l.b16 %v472
      %v498 = vunpack.c.l.b16 %v473
      %v499 = vpack.c.b16 %v491, %v490
      %v500 = vpack.c.b16 %v493, %v492
      %v501 = vpack.c.b16 %v495, %v494
      %v502 = vpack.c.b16 %v497, %v496
      %v503 = vpack.c.b16 %v498, %v498
      %v509 = vsel %vm342, %v480, 0
      %v512 = vsel %vm204, %v503, 0
      %514 = vmatprep.subr.bf16.mxu0 0
      %515 = vmatpush1.bf16.msra.mxu0 0
      %516 = vmatprep.subr.bf16.mxu0 0
      %517 = vmatpush1.bf16.msra.mxu0 0
      %518 = vmatprep.subr.bf16.mxu0 0
      %519 = vmatpush1.bf16.msra.mxu0 0
      %520 = vmatprep.subr.bf16.mxu0 0
      %521 = vmatpush1.bf16.msra.mxu0 %v512
      %522 = vmatprep.subr.bf16.mxu0 0
      %523 = vmatpush1.bf16.msra.mxu0 %v502
      %524 = vmatprep.subr.bf16.mxu0 0
      %525 = vmatpush1.bf16.msra.mxu0 %v501
      %526 = vmatprep.subr.bf16.mxu0 0
      %527 = vmatpush1.bf16.msra.mxu0 %v500
      %528 = vmatprep.subr.bf16.mxu0 0
      %529 = vmatpush1.bf16.msra.mxu0 %v499
      %530 = vmatprep.subr.bf16.mxu0 0
      %531 = vmatpush2.bf16.msra.mxu0 0
      %532 = vmatprep.subr.bf16.mxu0 0
      %533 = vmatpush2.bf16.msra.mxu0 0
      %534 = vmatprep.subr.bf16.mxu0 0
      %535 = vmatpush2.bf16.msra.mxu0 0
      %536 = vmatprep.subr.bf16.mxu0 0
      %537 = vmatpush2.bf16.msra.mxu0 0
      %538 = vmatprep.subr.bf16.mxu0 0
      %539 = vmatpush2.bf16.msra.mxu0 0
      %540 = vmatprep.subr.bf16.mxu0 0
      %541 = vmatpush2.bf16.msra.mxu0 0
      %542 = vmatprep.subr.bf16.mxu0 0
      %543 = vmatpush2.bf16.msra.mxu0 0
      %544 = vmatprep.subr.bf16.mxu0 0
      %545 = vmatpush2.bf16.msra.mxu0 0
      %546 = vmatprep.mubr.bf16.mxu0 0
      %547 = vmatmul.mubr.bf16.gmra.mxu0 %v509
      %v548 = vpop.f32.mrf.mxu0
      %v549 = vadd.f32 0.0, %v548
      %v550 = vpop.f32.mrf.mxu0
      %v551 = vpop.f32.mrf.mxu0
      %v552 = vadd.f32 0.0, %v551
      %v553 = vpop.f32.mrf.mxu0
      %554 = vdwg.mxu0
      %v555 = vadd.f32 %v457, %v549
      %v556 = vadd.f32 %v460, %v552
      %v557 = vmul.f32 %v555, 0.01
      %v558 = vmul.f32 %v556, 0.01
      %v559 = vmax.f32 %v555, %v557
      %v560 = vmax.f32 %v556, %v558
      %v561 = vpack.c.bf16 %v560, %v559
      %v563 = vunpack.c.l.b16 %v561
      %v564 = vunpack.c.h.b16 %v561
      %v565 = vpack.c.b16 %v563, %v563
      %v566 = vpack.c.b16 %v564, %v564
      %v568 = vshrl.u32 %v565, 16
      %v570 = vrot.slane %v568, 7
      %v571 = vshll.u32 %v565, 16
      %v573 = vor.u32 %v570, %v571
      %v574 = vrot.slane %v570, 4
      %v576 = vshrl.u32 %v566, 16
      %v578 = vrot.slane %v576, 7
      %v579 = vshll.u32 %v566, 16
      %v581 = vor.u32 %v578, %v579
      %v582 = vsel %vm232, %v574, %v581
      %v583 = vrot.slane %v578, 4
      %584 = vrot.lane.b32.xlu0 %v573, 8
      %v585 = vpop.permute.xlu0 %584
      %586 = vrot.lane.b32.xlu0 %v582, 8
      %v587 = vpop.permute.xlu0 %586
      %588 = vrot.lane.b32.xlu0 %v583, 8
      %v589 = vpop.permute.xlu0 %588
      %v590 = vrot.slane %v585, 4
      %v591 = vrot.slane %v587, 4
      %v592 = vrot.slane %v589, 4
      %vm593 = vcmask 64512
      %v594 = vsel %vm593, %v590, %v585
      %v595 = vsel %vm593, %v591, %v587
      %v596 = vsel %vm593, %v592, %v589
      %vm600 = vcmask 1043520
      %vm601 = vmand %vm600, %vm260
      %vm602 = vcmask 64516
      %vm603 = vsmask.f32 7954
      %vm604 = vmand %vm602, %vm603
      %vm605 = vmor %vm604, %vm601
      %v606 = vld [vmem:[#allocation3] sm:$0xff]
      %v607 = vsel %vm605, %v594, %v606
      %608 = vst [vmem:[#allocation3] sm:$0xff] %v607
      %vm609 = vcmask 1043520
      %vm610 = vcmask 64516
      %vm611 = vmor %vm610, %vm609
      %612 = vst.msk [vmem:[#allocation3 + $0x8] sm:$0xff] %vm611, %v595
      %vm613 = vcmask 1040448
      %vm614 = vmand %vm613, %vm230
      %vm615 = vcmask 61444
      %vm616 = vsmask.f32 4352
      %vm617 = vmand %vm615, %vm616
      %vm618 = vmor %vm617, %vm614
      %v619 = vld [vmem:[#allocation3 + $0x10] sm:$0x11]
      %v620 = vsel %vm618, %v596, %v619
      %621 = vst [vmem:[#allocation3 + $0x10] sm:$0x11] %v620
      %v622 = vld [vmem:[#allocation3] sm:$0xff]
      %v623 = vld [vmem:[#allocation3 + $0x8] sm:$0xff]
      %v624 = vld [vmem:[%s3] sm:$0xf]
      %v625 = vld [vmem:[%s3 + $0x4] sm:$0xf]
      %v626 = vld [vmem:[%s3 + $0x8] sm:$0xf]
      %v627 = vld [vmem:[%s3 + $0xc] sm:$0xf]
      %v628 = vld [vmem:[%s3 + $0x10] sm:$0xf]
      %v629 = vld [vmem:[%s3 + $0x14] sm:$0xf]
      %v630 = vld [vmem:[%s3 + $0x18] sm:$0xf]
      %v631 = vld [vmem:[%s3 + $0x1c] sm:$0xf]
      %v632 = vld [vmem:[%s3 + $0x20] sm:$0xf]
      %v633 = vld [vmem:[%s3 + $0x24] sm:$0xf]
      %v634 = vld [vmem:[%s3 + $0x28] sm:$0xf]
      %v635 = vld [vmem:[%s3 + $0x2c] sm:$0xf]
      %v636 = vld [vmem:[%s3 + $0x30] sm:$0xf]
      %v637 = vld [vmem:[%s3 + $0x34] sm:$0xf]
      %v638 = vld [vmem:[%s3 + $0x38] sm:$0xf]
      %v639 = vld [vmem:[%s3 + $0x3c] sm:$0xf]
      %v640 = vld [vmem:[%s3 + $0x40] sm:$0xf]
      %v641 = vld [vmem:[%s3 + $0x44] sm:$0xf]
      %v642 = vld [vmem:[#allocation3 + $0x10] sm:$0x11]
      %s643 = scalar_lea.vmem %s3, 72
      %v644 = vld [vmem:[%s643] sm:$0xf]
      %v645 = vld [vmem:[%s643 + $0x4] sm:$0xf]
      %v646 = vld [vmem:[%s643 + $0x8] sm:$0xf]
      %v647 = vld [vmem:[%s643 + $0xc] sm:$0xf]
      %v648 = vld [vmem:[%s643 + $0x10] sm:$0xf]
      %v649 = vld [vmem:[%s643 + $0x14] sm:$0xf]
      %v650 = vld [vmem:[%s643 + $0x18] sm:$0xf]
      %v651 = vld [vmem:[%s643 + $0x1c] sm:$0xf]
      %v652 = vld [vmem:[%s643 + $0x20] sm:$0xf]
      %v653 = vld [vmem:[%s643 + $0x24] sm:$0xf]
      %v654 = vld [vmem:[%s643 + $0x28] sm:$0xf]
      %v655 = vld [vmem:[%s643 + $0x2c] sm:$0xf]
      %v656 = vld [vmem:[%s643 + $0x30] sm:$0xf]
      %v657 = vld [vmem:[%s643 + $0x34] sm:$0xf]
      %v658 = vld [vmem:[%s643 + $0x38] sm:$0xf]
      %v659 = vld [vmem:[%s643 + $0x3c] sm:$0xf]
      %v660 = vld [vmem:[%s643 + $0x40] sm:$0xf]
      %v661 = vld [vmem:[%s643 + $0x44] sm:$0xf]
      %v665 = vunpack.c.l.b16 %v622
      %v666 = vunpack.c.h.b16 %v622
      %v667 = vunpack.c.l.b16 %v623
      %v668 = vunpack.c.h.b16 %v623
      %v669 = vunpack.c.l.b16 %v642
      %v670 = vunpack.c.h.b16 %v642
      %v671 = vpack.c.b16 %v667, %v665
      %v672 = vpack.c.b16 %v668, %v666
      %v673 = vpack.c.b16 %v669, %v669
      %v674 = vpack.c.b16 %v670, %v670
      %v676 = vshrl.u32 %v671, 16
      %v678 = vshll.u32 %v671, 16
      %v680 = vrot.slane %v678, 1
      %v681 = vor.u32 %v676, %v680
      %v683 = vshll.u32 %v673, 16
      %v685 = vrot.slane %v683, 1
      %v686 = vsel %vm302, %v681, %v685
      %v688 = vshrl.u32 %v672, 16
      %v690 = vshll.u32 %v672, 16
      %v692 = vrot.slane %v690, 1
      %v693 = vor.u32 %v688, %v692
      %v695 = vshll.u32 %v674, 16
      %v697 = vrot.slane %v695, 1
      %v698 = vsel %vm302, %v693, %v697
      %v718 = vunpack.c.l.b16 %v644
      %v719 = vunpack.c.l.b16 %v645
      %v720 = vunpack.c.l.b16 %v646
      %v721 = vunpack.c.l.b16 %v647
      %v722 = vunpack.c.l.b16 %v648
      %v723 = vunpack.c.l.b16 %v649
      %v724 = vunpack.c.l.b16 %v650
      %v725 = vunpack.c.l.b16 %v651
      %v726 = vunpack.c.l.b16 %v652
      %v727 = vunpack.c.l.b16 %v653
      %v728 = vunpack.c.l.b16 %v654
      %v729 = vunpack.c.l.b16 %v655
      %v730 = vunpack.c.l.b16 %v656
      %v731 = vunpack.c.l.b16 %v657
      %v732 = vunpack.c.l.b16 %v658
      %v733 = vunpack.c.l.b16 %v659
      %v734 = vunpack.c.l.b16 %v660
      %v735 = vunpack.c.l.b16 %v661
      %v736 = vpack.c.b16 %v719, %v718
      %v737 = vpack.c.b16 %v721, %v720
      %v738 = vpack.c.b16 %v723, %v722
      %v739 = vpack.c.b16 %v725, %v724
      %v740 = vpack.c.b16 %v727, %v726
      %v741 = vpack.c.b16 %v729, %v728
      %v742 = vpack.c.b16 %v731, %v730
      %v743 = vpack.c.b16 %v733, %v732
      %v744 = vpack.c.b16 %v735, %v734
      %vm754 = vcmask 130048
      %v756 = vsel %vm754, %v698, 0
      %758 = vmatprep.subr.bf16.mxu0 0
      %759 = vmatpush1.bf16.msra.mxu0 %v743
      %760 = vmatprep.subr.bf16.mxu0 0
      %761 = vmatpush1.bf16.msra.mxu0 %v742
      %762 = vmatprep.subr.bf16.mxu0 0
      %763 = vmatpush1.bf16.msra.mxu0 %v741
      %764 = vmatprep.subr.bf16.mxu0 0
      %765 = vmatpush1.bf16.msra.mxu0 %v740
      %766 = vmatprep.subr.bf16.mxu0 0
      %767 = vmatpush1.bf16.msra.mxu0 %v739
      %768 = vmatprep.subr.bf16.mxu0 0
      %769 = vmatpush1.bf16.msra.mxu0 %v738
      %770 = vmatprep.subr.bf16.mxu0 0
      %771 = vmatpush1.bf16.msra.mxu0 %v737
      %772 = vmatprep.subr.bf16.mxu0 0
      %773 = vmatpush1.bf16.msra.mxu0 %v736
      %774 = vmatprep.subr.bf16.mxu0 0
      %775 = vmatpush2.bf16.msra.mxu0 0
      %776 = vmatprep.subr.bf16.mxu0 0
      %777 = vmatpush2.bf16.msra.mxu0 0
      %778 = vmatprep.subr.bf16.mxu0 0
      %779 = vmatpush2.bf16.msra.mxu0 0
      %780 = vmatprep.subr.bf16.mxu0 0
      %781 = vmatpush2.bf16.msra.mxu0 0
      %782 = vmatprep.subr.bf16.mxu0 0
      %783 = vmatpush2.bf16.msra.mxu0 0
      %784 = vmatprep.subr.bf16.mxu0 0
      %785 = vmatpush2.bf16.msra.mxu0 0
      %786 = vmatprep.subr.bf16.mxu0 0
      %787 = vmatpush2.bf16.msra.mxu0 0
      %788 = vmatprep.subr.bf16.mxu0 0
      %789 = vmatpush2.bf16.msra.mxu0 %v744
      %790 = vmatprep.mubr.bf16.mxu0 %v756
      %791 = vmatmul.mubr.bf16.gmra.mxu0 %v686
      %v792 = vpop.f32.mrf.mxu0
      %v793 = vadd.f32 0.0, %v792
      %v794 = vpop.f32.mrf.mxu0
      %v795 = vpop.f32.mrf.mxu0
      %v796 = vadd.f32 0.0, %v795
      %v797 = vpop.f32.mrf.mxu0
      %798 = vdwg.mxu0
      %v818 = vunpack.c.l.b16 %v624
      %v819 = vunpack.c.l.b16 %v625
      %v820 = vunpack.c.l.b16 %v626
      %v821 = vunpack.c.l.b16 %v627
      %v822 = vunpack.c.l.b16 %v628
      %v823 = vunpack.c.l.b16 %v629
      %v824 = vunpack.c.l.b16 %v630
      %v825 = vunpack.c.l.b16 %v631
      %v826 = vunpack.c.l.b16 %v632
      %v827 = vunpack.c.l.b16 %v633
      %v828 = vunpack.c.l.b16 %v634
      %v829 = vunpack.c.l.b16 %v635
      %v830 = vunpack.c.l.b16 %v636
      %v831 = vunpack.c.l.b16 %v637
      %v832 = vunpack.c.l.b16 %v638
      %v833 = vunpack.c.l.b16 %v639
      %v834 = vunpack.c.l.b16 %v640
      %v835 = vunpack.c.l.b16 %v641
      %v836 = vpack.c.b16 %v819, %v818
      %v837 = vpack.c.b16 %v821, %v820
      %v838 = vpack.c.b16 %v823, %v822
      %v839 = vpack.c.b16 %v825, %v824
      %v840 = vpack.c.b16 %v827, %v826
      %v841 = vpack.c.b16 %v829, %v828
      %v842 = vpack.c.b16 %v831, %v830
      %v843 = vpack.c.b16 %v833, %v832
      %v844 = vpack.c.b16 %v835, %v834
      %v854 = vsel %vm754, %v672, 0
      %856 = vmatprep.subr.bf16.mxu0 0
      %857 = vmatpush1.bf16.msra.mxu0 %v843
      %858 = vmatprep.subr.bf16.mxu0 0
      %859 = vmatpush1.bf16.msra.mxu0 %v842
      %860 = vmatprep.subr.bf16.mxu0 0
      %861 = vmatpush1.bf16.msra.mxu0 %v841
      %862 = vmatprep.subr.bf16.mxu0 0
      %863 = vmatpush1.bf16.msra.mxu0 %v840
      %864 = vmatprep.subr.bf16.mxu0 0
      %865 = vmatpush1.bf16.msra.mxu0 %v839
      %866 = vmatprep.subr.bf16.mxu0 0
      %867 = vmatpush1.bf16.msra.mxu0 %v838
      %868 = vmatprep.subr.bf16.mxu0 0
      %869 = vmatpush1.bf16.msra.mxu0 %v837
      %870 = vmatprep.subr.bf16.mxu0 0
      %871 = vmatpush1.bf16.msra.mxu0 %v836
      %872 = vmatprep.subr.bf16.mxu0 0
      %873 = vmatpush2.bf16.msra.mxu0 0
      %874 = vmatprep.subr.bf16.mxu0 0
      %875 = vmatpush2.bf16.msra.mxu0 0
      %876 = vmatprep.subr.bf16.mxu0 0
      %877 = vmatpush2.bf16.msra.mxu0 0
      %878 = vmatprep.subr.bf16.mxu0 0
      %879 = vmatpush2.bf16.msra.mxu0 0
      %880 = vmatprep.subr.bf16.mxu0 0
      %881 = vmatpush2.bf16.msra.mxu0 0
      %882 = vmatprep.subr.bf16.mxu0 0
      %883 = vmatpush2.bf16.msra.mxu0 0
      %884 = vmatprep.subr.bf16.mxu0 0
      %885 = vmatpush2.bf16.msra.mxu0 0
      %886 = vmatprep.subr.bf16.mxu0 0
      %887 = vmatpush2.bf16.msra.mxu0 %v844
      %888 = vmatprep.mubr.bf16.mxu0 %v854
      %889 = vmatmul.mubr.bf16.gmra.mxu0 %v671
      %v890 = vpop.f32.mrf.mxu0
      %v891 = vadd.f32 %v793, %v890
      %v892 = vpop.f32.mrf.mxu0
      %v893 = vpop.f32.mrf.mxu0
      %v894 = vadd.f32 %v796, %v893
      %v895 = vpop.f32.mrf.mxu0
      %896 = vdwg.mxu0
      %v897 = vld [vmem:[#allocation3] sm:$0xee]
      %s898 = scalar_lea.vmem %s3, 144
      %v899 = vld [vmem:[%s898] sm:$0xf]
      %v900 = vld [vmem:[%s898 + $0x4] sm:$0xf]
      %v901 = vld [vmem:[%s898 + $0x8] sm:$0xf]
      %v902 = vld [vmem:[%s898 + $0xc] sm:$0xf]
      %v903 = vld [vmem:[%s898 + $0x10] sm:$0xf]
      %v904 = vld [vmem:[%s898 + $0x14] sm:$0xf]
      %v905 = vld [vmem:[%s898 + $0x18] sm:$0xf]
      %v906 = vld [vmem:[%s898 + $0x1c] sm:$0xf]
      %v907 = vld [vmem:[%s898 + $0x20] sm:$0xf]
      %v908 = vld [vmem:[%s898 + $0x24] sm:$0xf]
      %v909 = vld [vmem:[%s898 + $0x28] sm:$0xf]
      %v910 = vld [vmem:[%s898 + $0x2c] sm:$0xf]
      %v911 = vld [vmem:[%s898 + $0x30] sm:$0xf]
      %v912 = vld [vmem:[%s898 + $0x34] sm:$0xf]
      %v913 = vld [vmem:[%s898 + $0x38] sm:$0xf]
      %v914 = vld [vmem:[%s898 + $0x3c] sm:$0xf]
      %v915 = vld [vmem:[%s898 + $0x40] sm:$0xf]
      %v916 = vld [vmem:[%s898 + $0x44] sm:$0xf]
      %v918 = vunpack.c.l.b16 %v897
      %v919 = vunpack.c.h.b16 %v897
      %v920 = vpack.c.b16 %v667, %v918
      %v921 = vpack.c.b16 %v668, %v919
      %v922 = vrot.slane %v920, 1
      %v923 = vrot.slane %v673, 1
      %v924 = vsel %vm477, %v922, %v923
      %v925 = vrot.slane %v921, 1
      %v926 = vrot.slane %v674, 1
      %v927 = vsel %vm477, %v925, %v926
      %v947 = vunpack.c.l.b16 %v899
      %v948 = vunpack.c.l.b16 %v900
      %v949 = vunpack.c.l.b16 %v901
      %v950 = vunpack.c.l.b16 %v902
      %v951 = vunpack.c.l.b16 %v903
      %v952 = vunpack.c.l.b16 %v904
      %v953 = vunpack.c.l.b16 %v905
      %v954 = vunpack.c.l.b16 %v906
      %v955 = vunpack.c.l.b16 %v907
      %v956 = vunpack.c.l.b16 %v908
      %v957 = vunpack.c.l.b16 %v909
      %v958 = vunpack.c.l.b16 %v910
      %v959 = vunpack.c.l.b16 %v911
      %v960 = vunpack.c.l.b16 %v912
      %v961 = vunpack.c.l.b16 %v913
      %v962 = vunpack.c.l.b16 %v914
      %v963 = vunpack.c.l.b16 %v915
      %v964 = vunpack.c.l.b16 %v916
      %v965 = vpack.c.b16 %v948, %v947
      %v966 = vpack.c.b16 %v950, %v949
      %v967 = vpack.c.b16 %v952, %v951
      %v968 = vpack.c.b16 %v954, %v953
      %v969 = vpack.c.b16 %v956, %v955
      %v970 = vpack.c.b16 %v958, %v957
      %v971 = vpack.c.b16 %v960, %v959
      %v972 = vpack.c.b16 %v962, %v961
      %v973 = vpack.c.b16 %v964, %v963
      %v984 = vsel %vm754, %v927, 0
      %986 = vmatprep.subr.bf16.mxu0 0
      %987 = vmatpush1.bf16.msra.mxu0 %v972
      %988 = vmatprep.subr.bf16.mxu0 0
      %989 = vmatpush1.bf16.msra.mxu0 %v971
      %990 = vmatprep.subr.bf16.mxu0 0
      %991 = vmatpush1.bf16.msra.mxu0 %v970
      %992 = vmatprep.subr.bf16.mxu0 0
      %993 = vmatpush1.bf16.msra.mxu0 %v969
      %994 = vmatprep.subr.bf16.mxu0 0
      %995 = vmatpush1.bf16.msra.mxu0 %v968
      %996 = vmatprep.subr.bf16.mxu0 0
      %997 = vmatpush1.bf16.msra.mxu0 %v967
      %998 = vmatprep.subr.bf16.mxu0 0
      %999 = vmatpush1.bf16.msra.mxu0 %v966
      %1000 = vmatprep.subr.bf16.mxu0 0
      %1001 = vmatpush1.bf16.msra.mxu0 %v965
      %1002 = vmatprep.subr.bf16.mxu0 0
      %1003 = vmatpush2.bf16.msra.mxu0 0
      %1004 = vmatprep.subr.bf16.mxu0 0
      %1005 = vmatpush2.bf16.msra.mxu0 0
      %1006 = vmatprep.subr.bf16.mxu0 0
      %1007 = vmatpush2.bf16.msra.mxu0 0
      %1008 = vmatprep.subr.bf16.mxu0 0
      %1009 = vmatpush2.bf16.msra.mxu0 0
      %1010 = vmatprep.subr.bf16.mxu0 0
      %1011 = vmatpush2.bf16.msra.mxu0 0
      %1012 = vmatprep.subr.bf16.mxu0 0
      %1013 = vmatpush2.bf16.msra.mxu0 0
      %1014 = vmatprep.subr.bf16.mxu0 0
      %1015 = vmatpush2.bf16.msra.mxu0 0
      %1016 = vmatprep.subr.bf16.mxu0 0
      %1017 = vmatpush2.bf16.msra.mxu0 %v973
      %1018 = vmatprep.mubr.bf16.mxu0 %v984
      %1019 = vmatmul.mubr.bf16.gmra.mxu0 %v924
      %v1020 = vpop.f32.mrf.mxu0
      %v1021 = vadd.f32 0.0, %v1020
      %v1022 = vpop.f32.mrf.mxu0
      %v1023 = vpop.f32.mrf.mxu0
      %v1024 = vadd.f32 0.0, %v1023
      %v1025 = vpop.f32.mrf.mxu0
      %1026 = vdwg.mxu0
      %v1027 = vadd.f32 %v891, %v1021
      %v1028 = vadd.f32 %v894, %v1024
      %v1029 = vmul.f32 %v1027, 0.01
      %v1030 = vmul.f32 %v1028, 0.01
      %v1031 = vmax.f32 %v1027, %v1029
      %v1032 = vmax.f32 %v1028, %v1030
      %1033 = vst [vmem:[%s197] sm:$0xff] %v1031
      %1034 = vst [vmem:[%s197 + $0x8] sm:$0xff] %v1032
      %p1035 = scmp.lt.s32.totalorder %s15, 1
      %s1036 = scalar_select %p1035, %s15, 1
      %s1037 = smul.addr %s1036, 2
      %s1038 = smul.addr %s1037, 8
      %s1039 = scalar_lea.vmem %s4, %s1038
      // Predicated region
      $region37: #{decoder_block.1} parent=35 // pred_check
        %p1040 = pneg %p122
      $region38: #{decoder_block.1} parent=35 // pred_check_branch
        %1042 = sbr.rel (%p1040) target = $region40
      $region39: #{decoder_block.1} parent=35 // pred_region
        _
      $region40: #{decoder_block.1} parent=35 // pred_fallthru
        _
    $region36: #{decoder_block.1} parent=5 // pred_fallthru
      _
    %p1043 = scmp.le.s32.totalorder 2, %s10
    // Predicated region
    $region41: #{decoder_block.1} parent=5 // pred_check
      %p1044 = pneg %p1043
    $region42: #{decoder_block.1} parent=5 // pred_check_branch
      %1046 = sbr.rel (%p1044) target = $region44
    $region43: #{decoder_block.1} parent=5 // pred_region
      %s1047 = ssub.s32 %s10, 2
      // Predicated region
      $region45: #{decoder_block.1} parent=43 // pred_check
        %p1048 = pneg %p128
      $region46: #{decoder_block.1} parent=43 // pred_check_branch
        %1050 = sbr.rel (%p1048) target = $region48
      $region47: #{decoder_block.1} parent=43 // pred_region
        %p1051 = scmp.lt.s32.totalorder %s16, 1
        %s1052 = scalar_select %p1051, %s16, 1
        %s1053 = smul.addr %s1052, 2
        %s1054 = smul.addr %s1053, 8
        %s1055 = scalar_lea.vmem %s4, %s1054
      $region48: #{decoder_block.1} parent=43 // pred_fallthru
        _
    $region44: #{decoder_block.1} parent=5 // pred_fallthru
      _
  $region6: #{decoder_block.1} parent=0 // loop_footer
    %s14 = sadd.s32 1, %s10
  $region7: #{decoder_block.1} parent=0 // loop_footer_branch
    %9 = sbr.rel target = $region3
  $region8: #{decoder_block.1} parent=0 // loop_exit
    _

</llo_original>
